<compile_context>
chip_gen: v7x
topology: tpu7x:2x2x1
jax: 0.10.0
libtpu: 0.0.40
codegen_flags: <defaults>
</compile_context>

<pallas_src>
import functools

import jax
import jax.numpy as jnp
from jax import lax
from jax.experimental import pallas as pl
from jax.experimental.pallas import tpu as pltpu


_NEG_INF = float(-1e30)  # finite "-inf": exp() underflows to 0, no NaNs


def _round_up(x, m):
    return (x + m - 1) // m * m


# ---------------------------------------------------------------------------
# Kernel 1: fused QKV projection.  x_tile (bm, C) @ w_qkv^T (C, 3C) on the MXU,
# with the softmax scale folded into q on the f32 accumulator.
# ---------------------------------------------------------------------------
def _qkv_proj_kernel(x_ref, w_ref, q_ref, k_ref, v_ref, *, scale):
    c = q_ref.shape[-1]
    acc = jnp.dot(x_ref[...], w_ref[...],
                  preferred_element_type=jnp.float32)          # (bm, 3C) f32
    q_ref[...] = (acc[:, :c] * scale).astype(q_ref.dtype)
    k_ref[...] = acc[:, c:2 * c].astype(k_ref.dtype)
    v_ref[...] = acc[:, 2 * c:3 * c].astype(v_ref.dtype)


# ---------------------------------------------------------------------------
# Kernel 2: flash-style attention + output projection for one (batch, q-tile).
# ---------------------------------------------------------------------------
def _flash_attn_proj_kernel(q_ref, k_ref, v_ref, wp_ref, b_ref, o_ref, *,
                            num_heads, n_valid, block_k):
    block_q, c = q_ref.shape
    hd = c // num_heads
    n_pad = k_ref.shape[0]

    # Static tile bookkeeping: all-but-last tiles are fully valid; at most one
    # ragged tail tile needs the key-padding mask.
    num_full = n_valid // block_k                 # fully-valid K/V tiles
    has_tail = num_full * block_k < n_pad         # single padded tail tile

    q = q_ref[...]                                # (block_q, C), pre-scaled
    # Static per-head column slices (no transposes / relayouts).
    q_heads = [q[:, h * hd:(h + 1) * hd] for h in range(num_heads)]

    def tile_update(start, carry, kmask):
        """One online-softmax update with the K/V tile at `start`."""
        ms, ls, accs = carry                      # tuples of length H
        kt = k_ref[pl.ds(start, block_k), :]      # (block_k, C)
        vt = v_ref[pl.ds(start, block_k), :]      # (block_k, C)
        new_m, new_l, new_acc = [], [], []
        for h in range(num_heads):                # static unroll over heads
            kh = kt[:, h * hd:(h + 1) * hd]       # (block_k, hd)
            vh = vt[:, h * hd:(h + 1) * hd]       # (block_k, hd)
            # Scores: contract head dims of q and k directly (no k transpose).
            s = lax.dot_general(q_heads[h], kh, (((1,), (1,)), ((), ())),
                                preferred_element_type=jnp.float32)  # (bq, bk)
            if kmask is not None:
                s = jnp.where(kmask, s, _NEG_INF)
            m_prev, l_prev, acc_prev = ms[h], ls[h], accs[h]
            m_new = jnp.maximum(m_prev, jnp.max(s, axis=-1, keepdims=True))
            alpha = jnp.exp(m_prev - m_new)       # (bq, 1)
            p = jnp.exp(s - m_new)                # (bq, bk) f32
            l_new = alpha * l_prev + jnp.sum(p, axis=-1, keepdims=True)
            pv = lax.dot_general(p.astype(vh.dtype), vh,
                                 (((1,), (0,)), ((), ())),
                                 preferred_element_type=jnp.float32)  # (bq, hd)
            new_m.append(m_new)
            new_l.append(l_new)
            new_acc.append(alpha * acc_prev + pv)
        return tuple(new_m), tuple(new_l), tuple(new_acc)

    m0 = tuple(jnp.full((block_q, 1), _NEG_INF, jnp.float32)
               for _ in range(num_heads))
    l0 = tuple(jnp.zeros((block_q, 1), jnp.float32) for _ in range(num_heads))
    a0 = tuple(jnp.zeros((block_q, hd), jnp.float32) for _ in range(num_heads))
    carry = (m0, l0, a0)

    # Hot loop over fully-valid K/V tiles: no mask, no iota, no where.
    if num_full > 0:
        if num_full <= 4:
            # Common ViT case (1-4 tiles): straight-line code for the LLO
            # scheduler.
            for t in range(num_full):
                carry = tile_update(t * block_k, carry, None)
        else:
            def kv_step(t, cur):
                start = pl.multiple_of(t * block_k, block_k)
                return tile_update(start, cur, None)
            carry = lax.fori_loop(0, num_full, kv_step, carry)

    # Single ragged tail tile: only place that pays for the key-padding mask.
    if has_tail:
        start = num_full * block_k                # static
        kidx = start + lax.broadcasted_iota(jnp.int32, (1, block_k), 1)
        kmask = kidx < n_valid                    # (1, block_k)
        carry = tile_update(start, carry, kmask)

    ms, ls, accs = carry

    # Normalize once at the end of the K loop (EUP reciprocal, not a VALU div).
    out_heads = [(accs[h] * pl.reciprocal(ls[h], approx=True)).astype(q.dtype)
                 for h in range(num_heads)]
    merged = out_heads[0] if num_heads == 1 else jnp.concatenate(out_heads, axis=-1)

    # Output projection (+ bias).  attn_drop / proj_drop: identity (eval mode).
    y = jnp.dot(merged, wp_ref[...],
                preferred_element_type=jnp.float32) + b_ref[...]
    o_ref[...] = y.astype(o_ref.dtype)


# ---------------------------------------------------------------------------
# Wrapper
# ---------------------------------------------------------------------------
def attention_forward(x, w_qkv, w_proj, b_proj, num_heads, *,
                      block=256, compute_dtype=jnp.bfloat16):
    """x: (B, N, C); w_qkv: (3C, C); w_proj: (C, C); b_proj: (C,) (nn.Linear layouts)."""
    B, N, C = x.shape
    assert C % num_heads == 0
    hd = C // num_heads
    scale = float(hd) ** -0.5

    # One tile size for both the query grid axis and the in-kernel K/V loop.
    blk = min(_round_up(block, 8), _round_up(N, 8))
    n_pad = _round_up(N, blk)

    xc = x.astype(compute_dtype)
    if n_pad != N:
        xc = jnp.pad(xc, ((0, 0), (0, n_pad - N), (0, 0)))

    wqkv_t = jnp.transpose(w_qkv).astype(compute_dtype)        # (C, 3C)
    wproj_t = jnp.transpose(w_proj).astype(compute_dtype)      # (C, C)
    bias = b_proj.reshape(1, C).astype(jnp.float32)            # (1, C)

    vmem_lim = 48 * 1024 * 1024

    # ---- kernel 1: fused QKV projection over all (B * n_pad) rows ----
    m_rows = B * n_pad
    x2d = xc.reshape(m_rows, C)
    q2d, k2d, v2d = pl.pallas_call(
        functools.partial(_qkv_proj_kernel, scale=scale),
        out_shape=[jax.ShapeDtypeStruct((m_rows, C), compute_dtype)] * 3,
        grid_spec=pltpu.PrefetchScalarGridSpec(
            num_scalar_prefetch=0,
            grid=(m_rows // blk,),
            in_specs=[
                pl.BlockSpec((blk, C), lambda i: (i, 0)),      # x rows
                pl.BlockSpec((C, 3 * C), lambda i: (0, 0)),    # w_qkv^T (constant)
            ],
            out_specs=[pl.BlockSpec((blk, C), lambda i: (i, 0))] * 3,
        ),
        compiler_params=pltpu.CompilerParams(
            dimension_semantics=("parallel",),
            vmem_limit_bytes=vmem_lim),
    )(x2d, wqkv_t)

    q = q2d.reshape(B, n_pad, C)
    k = k2d.reshape(B, n_pad, C)
    v = v2d.reshape(B, n_pad, C)

    # ---- kernel 2: flash attention + output projection ----
    out = pl.pallas_call(
        functools.partial(_flash_attn_proj_kernel, num_heads=num_heads,
                          n_valid=N, block_k=blk),
        out_shape=jax.ShapeDtypeStruct((B, n_pad, C), x.dtype),
        grid_spec=pltpu.PrefetchScalarGridSpec(
            num_scalar_prefetch=0,
            grid=(B, n_pad // blk),
            in_specs=[
                pl.BlockSpec((None, blk, C), lambda b, i: (b, i, 0)),    # q tile
                pl.BlockSpec((None, n_pad, C), lambda b, i: (b, 0, 0)),  # k (full seq)
                pl.BlockSpec((None, n_pad, C), lambda b, i: (b, 0, 0)),  # v (full seq)
                pl.BlockSpec((C, C), lambda b, i: (0, 0)),               # w_proj^T
                pl.BlockSpec((1, C), lambda b, i: (0, 0)),               # proj bias
            ],
            out_specs=pl.BlockSpec((None, blk, C), lambda b, i: (b, i, 0)),
        ),
        compiler_params=pltpu.CompilerParams(
            dimension_semantics=("parallel", "parallel"),
            vmem_limit_bytes=vmem_lim),
    )(q, k, v, wproj_t, bias)

    if n_pad != N:
        out = out[:, :N, :]
    return out


def attention_reference(x, w_qkv, w_proj, b_proj, num_heads):
    """Pure-JAX f32 reference mirroring the PyTorch forward (eval mode)."""
    B, N, C = x.shape
    hd = C // num_heads
    scale = float(hd) ** -0.5
    qkv = jnp.einsum('bnc,oc->bno', x, w_qkv)                  # (B, N, 3C)
    qkv = qkv.reshape(B, N, 3, num_heads, hd).transpose(2, 0, 3, 1, 4)
    q, k, v = qkv[0], qkv[1], qkv[2]                           # (B, H, N, hd)
    attn = jnp.einsum('bhqd,bhkd->bhqk', q, k) * scale
    attn = jax.nn.softmax(attn, axis=-1)
    out = jnp.einsum('bhqk,bhkd->bhqd', attn, v)
    out = out.transpose(0, 2, 1, 3).reshape(B, N, C)
    return jnp.einsum('bnc,oc->bno', out, w_proj) + b_proj


if __name__ == "__main__":
    # Small but TPU-friendly shapes: lane-dense C (=128), ragged N (=80) so the
    # key-mask and multi-tile code paths are exercised with block=64.
    B, N, C = 2, 80, 128
    num_heads = 8

    key = jax.random.PRNGKey(0)
    kx, kq, kp, kb = jax.random.split(key, 4)
    x = jax.random.normal(kx, (B, N, C), dtype=jnp.float32)
    # nn.Linear layouts: (out_features, in_features); qkv has no bias.
    w_qkv = jax.random.normal(kq, (3 * C, C), dtype=jnp.float32) * 0.1
    w_proj = jax.random.normal(kp, (C, C), dtype=jnp.float32) * 0.1
    b_proj = jax.random.normal(kb, (C,), dtype=jnp.float32) * 0.1

    ref = attention_reference(x, w_qkv, w_proj, b_proj, num_heads)

    # f32-through-MXU path: checks the flash/tiling/masking algorithm itself
    # (straight-line K/V path + masked ragged tail tile).
    out_f32 = attention_forward(x, w_qkv, w_proj, b_proj, num_heads,
                                block=64, compute_dtype=jnp.float32)
    out_f32 = jax.block_until_ready(out_f32)
    assert out_f32.shape == (B, N, C)
    err32 = float(jnp.max(jnp.abs(out_f32 - ref)))
    assert jnp.allclose(out_f32, ref, atol=2e-2, rtol=2e-2), (
        f"f32 path max abs err = {err32}")

    # Small block to exercise the lax.fori_loop (many-tile) path as well.
    out_loop = attention_forward(x, w_qkv, w_proj, b_proj, num_heads,
                                 block=16, compute_dtype=jnp.float32)
    out_loop = jax.block_until_ready(out_loop)
    errlp = float(jnp.max(jnp.abs(out_loop - ref)))
    assert jnp.allclose(out_loop, ref, atol=2e-2, rtol=2e-2), (
        f"fori_loop path max abs err = {errlp}")

    # Default bf16-MXU / f32-accumulate path (production config): looser tol.
    out_bf16 = attention_forward(x, w_qkv, w_proj, b_proj, num_heads, block=64)
    out_bf16 = jax.block_until_ready(out_bf16)
    assert out_bf16.shape == (B, N, C)
    errbf = float(jnp.max(jnp.abs(out_bf16 - ref)))
    assert jnp.allclose(out_bf16, ref, atol=6e-2, rtol=6e-2), (
        f"bf16 path max abs err = {errbf}")

    print("KERNEL_OK")
</pallas_src>

<mosaic_0001>
module attributes {stable_mosaic.version = 11 : i64} {
  func.func @_qkv_proj_kernel(%arg0: i32, %arg1: memref<64x128xf32, #tpu.memory_space<vmem>>, %arg2: memref<128x384xf32, #tpu.memory_space<vmem>>, %arg3: memref<64x128xf32, #tpu.memory_space<vmem>>, %arg4: memref<64x128xf32, #tpu.memory_space<vmem>>, %arg5: memref<64x128xf32, #tpu.memory_space<vmem>>) attributes {dimension_semantics = [#tpu.dimension_semantics<parallel>], iteration_bounds = array<i64: 4>, scalar_prefetch = 0 : i64, scratch_operands = 0 : i64, tpu.core_type = #tpu.core_type<tc>, window_params = [{transform_indices = @transform_0, window_bounds = array<i64: 64, 128>}, {pipeline_mode = #tpu.pipeline_mode<synchronous>, transform_indices = @transform_1, window_bounds = array<i64: 128, 384>}, {transform_indices = @transform_2, window_bounds = array<i64: 64, 128>}, {transform_indices = @transform_3, window_bounds = array<i64: 64, 128>}, {transform_indices = @transform_4, window_bounds = array<i64: 64, 128>}]} {
    %c0 = arith.constant 0 : index
    %c0_0 = arith.constant 0 : index
    %0 = vector.load %arg1[%c0, %c0_0] : memref<64x128xf32, #tpu.memory_space<vmem>>, vector<64x128xf32>
    %c0_1 = arith.constant 0 : index
    %c0_2 = arith.constant 0 : index
    %1 = vector.load %arg2[%c0_1, %c0_2] : memref<128x384xf32, #tpu.memory_space<vmem>>, vector<128x384xf32>
    %cst = arith.constant dense<0.000000e+00> : vector<64x384xf32>
    %2 = tpu.matmul %0, %1, %cst {dimension_numbers = #tpu.dot_dimension_numbers<[1], [0], [0], [1], [0, 0, 1, 1], [], []>} : vector<64x128xf32>, vector<128x384xf32>, vector<64x384xf32> -> vector<64x384xf32>
    %3 = vector.extract_strided_slice %2 {offsets = [0, 0], sizes = [64, 128], strides = [1, 1]} : vector<64x384xf32> to vector<64x128xf32>
    %cst_3 = arith.constant 2.500000e-01 : f32
    %4 = vector.broadcast %cst_3 : f32 to vector<64x128xf32>
    %5 = arith.mulf %3, %4 : vector<64x128xf32>
    %c0_4 = arith.constant 0 : index
    %c0_5 = arith.constant 0 : index
    %6 = vector.load %arg3[%c0_4, %c0_5] : memref<64x128xf32, #tpu.memory_space<vmem>>, vector<64x128xf32>
    tpu.vector_store %arg3[%c0_4, %c0_5], %5 {strides = array<i32>} : memref<64x128xf32, #tpu.memory_space<vmem>>, vector<64x128xf32>,
    %7 = vector.extract_strided_slice %2 {offsets = [0, 128], sizes = [64, 128], strides = [1, 1]} : vector<64x384xf32> to vector<64x128xf32>
    %c0_6 = arith.constant 0 : index
    %c0_7 = arith.constant 0 : index
    %8 = vector.load %arg4[%c0_6, %c0_7] : memref<64x128xf32, #tpu.memory_space<vmem>>, vector<64x128xf32>
    tpu.vector_store %arg4[%c0_6, %c0_7], %7 {strides = array<i32>} : memref<64x128xf32, #tpu.memory_space<vmem>>, vector<64x128xf32>,
    %9 = vector.extract_strided_slice %2 {offsets = [0, 256], sizes = [64, 128], strides = [1, 1]} : vector<64x384xf32> to vector<64x128xf32>
    %c0_8 = arith.constant 0 : index
    %c0_9 = arith.constant 0 : index
    %10 = vector.load %arg5[%c0_8, %c0_9] : memref<64x128xf32, #tpu.memory_space<vmem>>, vector<64x128xf32>
    tpu.vector_store %arg5[%c0_8, %c0_9], %9 {strides = array<i32>} : memref<64x128xf32, #tpu.memory_space<vmem>>, vector<64x128xf32>,
    return
  }
  func.func @transform_0(%arg0: i32) -> (i32, i32) {
    %c0_i32 = arith.constant 0 : i32
    %c0_i32_0 = arith.constant 0 : i32
    return %arg0, %c0_i32 : i32, i32
  }
  func.func @transform_1(%arg0: i32) -> (i32, i32) {
    %c0_i32 = arith.constant 0 : i32
    %c0_i32_0 = arith.constant 0 : i32
    %c0_i32_1 = arith.constant 0 : i32
    return %c0_i32, %c0_i32_0 : i32, i32
  }
  func.func @transform_2(%arg0: i32) -> (i32, i32) {
    %c0_i32 = arith.constant 0 : i32
    %c0_i32_0 = arith.constant 0 : i32
    return %arg0, %c0_i32 : i32, i32
  }
  func.func @transform_3(%arg0: i32) -> (i32, i32) {
    %c0_i32 = arith.constant 0 : i32
    %c0_i32_0 = arith.constant 0 : i32
    return %arg0, %c0_i32 : i32, i32
  }
  func.func @transform_4(%arg0: i32) -> (i32, i32) {
    %c0_i32 = arith.constant 0 : i32
    %c0_i32_0 = arith.constant 0 : i32
    return %arg0, %c0_i32 : i32, i32
  }
}

</mosaic_0001>

<llo_original>
// kernel: tpu_custom_call.1
$region0: #{tpu_custom_call.1}
  #allocation0 [shape = 'u32[]', space=smem, size = 0x4, offset = 0x4, fixed_abs, tag = 'smem constant byte address 0x4 - core index']
  #allocation1 [shape = 'u32[144,128]{1,0:T(1,128)}', space=vmem, size = 0x12000, scoped, tag = 'internal scratch']
  %s0 = inlined_call_operand.hbm [shape: f32[256,128], index: 0, kind: input, shape index: {}]
  %s1 = inlined_call_operand.hbm [shape: f32[128,384], index: 1, kind: input, shape index: {}]
  %s2 = inlined_call_operand.hbm [shape: f32[256,128], index: 2, kind: output, shape index: {0}]
  %s3 = inlined_call_operand.hbm [shape: f32[256,128], index: 3, kind: output, shape index: {1}]
  %s4 = inlined_call_operand.hbm [shape: f32[256,128], index: 4, kind: output, shape index: {2}]
  %5 = xla_tuple %s2, %s3, %s4
  %s6 = sld [smem:[#allocation0]]
  $region65: #{tpu_custom_call.1} parent=0
    _
  %s8 = ssub.s32 1, %s6
  %s9 = scalar_select 0, %s8, %s6
  $region1: #{tpu_custom_call.1} parent=0
    #allocation2 [shape = 'u8[65536]{0}', space=vmem, size = 0x10000, scoped, tag = 'input window, operand 0']
    #allocation3 [shape = 's32[2]{0}', space=sflag, size = 0x8, scoped, tag = 'scoped memory for tpu_custom_call.1']
    #allocation4 [shape = 's32[2]{0}', space=sflag, size = 0x8, scoped, tag = 'scoped memory for tpu_custom_call.1']
    #allocation5 [shape = 'u8[196608]{0}', space=vmem, size = 0x30000, scoped, tag = 'input window, operand 1, single buffered']
    #allocation6 [shape = 's32[1]{0}', space=sflag, size = 0x4, scoped, tag = 'scoped memory for tpu_custom_call.1']
    #allocation7 [shape = 'u8[65536]{0}', space=vmem, size = 0x10000, scoped, tag = 'output window, operand 0']
    #allocation8 [shape = 'u8[65536]{0}', space=vmem, size = 0x10000, scoped, tag = 'output window, operand 1']
    #allocation9 [shape = 's32[2]{0}', space=sflag, size = 0x8, scoped, tag = 'scoped memory for tpu_custom_call.1']
    #allocation10 [shape = 'u8[65536]{0}', space=vmem, size = 0x10000, scoped, tag = 'output window, operand 2']
    %10 = vsyncpa [#allocation3], 0
    %s11 = scalar_lea.sflag [#allocation3], 1
    %12 = vsyncpa %s11, 0
    %13 = vsyncpa [#allocation6], 0
    %14 = vsyncpa [#allocation4], 0
    %s15 = scalar_lea.sflag [#allocation4], 1
    %16 = vsyncpa %s15, 0
    %17 = vsyncpa [#allocation9], 0
    %s18 = scalar_lea.sflag [#allocation9], 1
    %19 = vsyncpa %s18, 0
    loop: start=0, step=1, limit=6
    $region2: #{tpu_custom_call.1} parent=1 // loop_pre_header
      _
    $region3: #{tpu_custom_call.1} parent=1 // loop_header
      %s21 = sphi 0, %s25
      %p22 = scmp.ge.s32.totalorder %s21, 6
      %s31 = sphi 0, %s33
      %s34 = sphi 0, %s31
      %s35 = sphi 0, %s34
      %s51 = sphi 0, %s35
      %s55 = sphi 0, %s55
      %s57 = sphi 0, %s55
      %s58 = sphi 0, %s57
      %s72 = sphi 0, %s58
      %s78 = sphi 0, %s80
      %s81 = sphi 0, %s78
      %s82 = sphi 0, %s81
      %s98 = sphi 0, %s82
      %s104 = sphi 0, %s106
      %s107 = sphi 0, %s104
      %s108 = sphi 0, %s107
      %s124 = sphi 0, %s108
      %s130 = sphi 0, %s132
      %s133 = sphi 0, %s130
      %s134 = sphi 0, %s133
      %s150 = sphi 0, %s134
    $region4: #{tpu_custom_call.1} parent=1 // loop_header_branch
      %24 = sbr.rel (%p22) target = $region8
    $region5: #{tpu_custom_call.1} parent=1 // loop_body
      %s26 = ssub.s32 %s21, 1
      %s27 = ssub.s32 %s21, 2
      %s28 = sadd.s32 %s21, 1
      %s29 = ssub.s32 %s21, %s28
      %p30 = scmp.eq.s32.totalorder %s29, 0
      %s32 = sadd.s32 %s31, 1
      %s33 = scalar_select %p30, %s31, %s32
      %p36 = pneg %p30
      %p37 = scmp.eq.s32.totalorder %s21, 3
      %p38 = por %p36, %p37
      %p39 = scmp.ne.s32.totalorder %s31, %s34
      %p40 = scmp.eq.s32.totalorder %s21, 0
      %p41 = por %p39, %p40
      %p42 = scmp.ne.s32.totalorder %s31, %s34
      %p43 = scmp.eq.s32.totalorder %s26, 3
      %p44 = por %p42, %p43
      %p45 = scmp.ne.s32.totalorder %s34, %s35
      %p46 = scmp.eq.s32.totalorder %s26, 0
      %p47 = por %p45, %p46
      %p48 = scmp.ne.s32.totalorder %s34, %s35
      %p49 = scmp.eq.s32.totalorder %s27, 3
      %p50 = por %p48, %p49
      %p52 = scmp.ne.s32.totalorder %s35, %s51
      %p53 = scmp.eq.s32.totalorder %s27, 0
      %p54 = por %p52, %p53
      %s56 = sadd.s32 %s55, 1
      %p59 = scmp.eq.s32.totalorder %s21, 3
      %p60 = scmp.ne.s32.totalorder %s55, %s57
      %p61 = scmp.eq.s32.totalorder %s21, 0
      %p62 = por %p60, %p61
      %p63 = scmp.ne.s32.totalorder %s55, %s57
      %p64 = scmp.eq.s32.totalorder %s26, 3
      %p65 = por %p63, %p64
      %p66 = scmp.ne.s32.totalorder %s57, %s58
      %p67 = scmp.eq.s32.totalorder %s26, 0
      %p68 = por %p66, %p67
      %p69 = scmp.ne.s32.totalorder %s57, %s58
      %p70 = scmp.eq.s32.totalorder %s27, 3
      %p71 = por %p69, %p70
      %p73 = scmp.ne.s32.totalorder %s58, %s72
      %p74 = scmp.eq.s32.totalorder %s27, 0
      %p75 = por %p73, %p74
      %s76 = ssub.s32 %s21, %s28
      %p77 = scmp.eq.s32.totalorder %s76, 0
      %s79 = sadd.s32 %s78, 1
      %s80 = scalar_select %p77, %s78, %s79
      %p83 = pneg %p77
      %p84 = scmp.eq.s32.totalorder %s21, 3
      %p85 = por %p83, %p84
      %p86 = scmp.ne.s32.totalorder %s78, %s81
      %p87 = scmp.eq.s32.totalorder %s21, 0
      %p88 = por %p86, %p87
      %p89 = scmp.ne.s32.totalorder %s78, %s81
      %p90 = scmp.eq.s32.totalorder %s26, 3
      %p91 = por %p89, %p90
      %p92 = scmp.ne.s32.totalorder %s81, %s82
      %p93 = scmp.eq.s32.totalorder %s26, 0
      %p94 = por %p92, %p93
      %p95 = scmp.ne.s32.totalorder %s81, %s82
      %p96 = scmp.eq.s32.totalorder %s27, 3
      %p97 = por %p95, %p96
      %p99 = scmp.ne.s32.totalorder %s82, %s98
      %p100 = scmp.eq.s32.totalorder %s27, 0
      %p101 = por %p99, %p100
      %s102 = ssub.s32 %s21, %s28
      %p103 = scmp.eq.s32.totalorder %s102, 0
      %s105 = sadd.s32 %s104, 1
      %s106 = scalar_select %p103, %s104, %s105
      %p109 = pneg %p103
      %p110 = scmp.eq.s32.totalorder %s21, 3
      %p111 = por %p109, %p110
      %p112 = scmp.ne.s32.totalorder %s104, %s107
      %p113 = scmp.eq.s32.totalorder %s21, 0
      %p114 = por %p112, %p113
      %p115 = scmp.ne.s32.totalorder %s104, %s107
      %p116 = scmp.eq.s32.totalorder %s26, 3
      %p117 = por %p115, %p116
      %p118 = scmp.ne.s32.totalorder %s107, %s108
      %p119 = scmp.eq.s32.totalorder %s26, 0
      %p120 = por %p118, %p119
      %p121 = scmp.ne.s32.totalorder %s107, %s108
      %p122 = scmp.eq.s32.totalorder %s27, 3
      %p123 = por %p121, %p122
      %p125 = scmp.ne.s32.totalorder %s108, %s124
      %p126 = scmp.eq.s32.totalorder %s27, 0
      %p127 = por %p125, %p126
      %s128 = ssub.s32 %s21, %s28
      %p129 = scmp.eq.s32.totalorder %s128, 0
      %s131 = sadd.s32 %s130, 1
      %s132 = scalar_select %p129, %s130, %s131
      %p135 = pneg %p129
      %p136 = scmp.eq.s32.totalorder %s21, 3
      %p137 = por %p135, %p136
      %p138 = scmp.ne.s32.totalorder %s130, %s133
      %p139 = scmp.eq.s32.totalorder %s21, 0
      %p140 = por %p138, %p139
      %p141 = scmp.ne.s32.totalorder %s130, %s133
      %p142 = scmp.eq.s32.totalorder %s26, 3
      %p143 = por %p141, %p142
      %p144 = scmp.ne.s32.totalorder %s133, %s134
      %p145 = scmp.eq.s32.totalorder %s26, 0
      %p146 = por %p144, %p145
      %p147 = scmp.ne.s32.totalorder %s133, %s134
      %p148 = scmp.eq.s32.totalorder %s27, 3
      %p149 = por %p147, %p148
      %p151 = scmp.ne.s32.totalorder %s134, %s150
      %p152 = scmp.eq.s32.totalorder %s27, 0
      %p153 = por %p151, %p152
      %p154 = scmp.le.s32.totalorder 1, %s21
      %p155 = scmp.lt.s32.totalorder %s21, 5
      %p156 = pnand %p154, %p155
      %p157 = pneg %p156
      // Predicated region
      $region9: #{tpu_custom_call.1} parent=5 // pred_check
        _
      $region10: #{tpu_custom_call.1} parent=5 // pred_check_branch
        %159 = sbr.rel (%p156) target = $region12
      $region11: #{tpu_custom_call.1} parent=5 // pred_region
        %s160 = ssub.s32 %s21, 1
        // Predicated region
        $region13: #{tpu_custom_call.1} parent=11 // pred_check
          %p161 = pneg %p68
        $region14: #{tpu_custom_call.1} parent=11 // pred_check_branch
          %163 = sbr.rel (%p161) target = $region16
        $region15: #{tpu_custom_call.1} parent=11 // pred_region
          %s165 = ssub.s32 6144, 6144
          %166 = vsyncadd [#allocation6], %s165
          %s167 = sshll.u32 [#allocation5], 4
          %s168 = int_to_ptr.vmem [resolvable:$true] %s167
          %173 = dma.hbm_to_vmem [thread:$0]  %s1, 6144, %s168, [#allocation6], 384, 384, 24
        $region16: #{tpu_custom_call.1} parent=11 // pred_fallthru
          _
      $region12: #{tpu_custom_call.1} parent=5 // pred_fallthru
        _
      %p174 = scmp.lt.s32.totalorder %s21, 4
      // Predicated region
      $region17: #{tpu_custom_call.1} parent=5 // pred_check
        %p175 = pneg %p174
      $region18: #{tpu_custom_call.1} parent=5 // pred_check_branch
        %177 = sbr.rel (%p175) target = $region20
      $region19: #{tpu_custom_call.1} parent=5 // pred_region
        // Predicated region
        $region21: #{tpu_custom_call.1} parent=19 // pred_check
          %p178 = pneg %p41
        $region22: #{tpu_custom_call.1} parent=19 // pred_check_branch
          %180 = sbr.rel (%p178) target = $region24
        $region23: #{tpu_custom_call.1} parent=19 // pred_region
          %s181 = sand.u32 %s31, 1
          %s182 = scalar_lea.sflag [#allocation3], %s181
          %s183 = sand.u32 %s31, 1
          %s184 = smul.addr %s183, 64
          %s185 = scalar_lea.vmem [#allocation2], %s184
          %s186 = smul.u32 8, %s21
          %s188 = ssub.s32 1024, 1024
          %189 = vsyncadd %s182, %s188
          %s190 = smul.addr %s186, 128
          %s191 = scalar_lea.hbm %s0, %s190
          %s192 = sshll.u32 %s185, 4
          %s193 = int_to_ptr.vmem [resolvable:$true] %s192
          %198 = dma.hbm_to_vmem [thread:$0]  %s191, 1024, %s193, %s182, 128, 128, 8
        $region24: #{tpu_custom_call.1} parent=19 // pred_fallthru
          _
      $region20: #{tpu_custom_call.1} parent=5 // pred_fallthru
        _
      %p199 = scmp.le.s32.totalorder 1, %s21
      %p200 = scmp.lt.s32.totalorder %s21, 5
      %p201 = pnand %p199, %p200
      %p202 = pneg %p201
      // Predicated region
      $region25: #{tpu_custom_call.1} parent=5 // pred_check
        _
      $region26: #{tpu_custom_call.1} parent=5 // pred_check_branch
        %204 = sbr.rel (%p201) target = $region28
      $region27: #{tpu_custom_call.1} parent=5 // pred_region
        %s205 = ssub.s32 %s21, 1
        %s206 = sand.u32 %s34, 1
        %s207 = scalar_lea.sflag [#allocation3], %s206
        %s208 = sand.u32 %s34, 1
        %s209 = smul.addr %s208, 64
        %s210 = scalar_lea.vmem [#allocation2], %s209
        // Predicated region
        $region29: #{tpu_custom_call.1} parent=27 // pred_check
          %p211 = pneg %p47
        $region30: #{tpu_custom_call.1} parent=27 // pred_check_branch
          %213 = sbr.rel (%p211) target = $region32
        $region31: #{tpu_custom_call.1} parent=27 // pred_region
          %214 = dma.done %s207, 1024
        $region32: #{tpu_custom_call.1} parent=27 // pred_fallthru
          _
        // Predicated region
        $region33: #{tpu_custom_call.1} parent=27 // pred_check
          %p215 = pneg %p68
        $region34: #{tpu_custom_call.1} parent=27 // pred_check_branch
          %217 = sbr.rel (%p215) target = $region36
        $region35: #{tpu_custom_call.1} parent=27 // pred_region
          %218 = dma.done [#allocation6], 6144
        $region36: #{tpu_custom_call.1} parent=27 // pred_fallthru
          _
        %s219 = sand.u32 %s34, 1
        %s220 = scalar_lea.sflag [#allocation3], %s219
        %s221 = sand.u32 %s34, 1
        %s222 = smul.addr %s221, 64
        %s223 = scalar_lea.vmem [#allocation2], %s222
        %p224 = pneg %p47
        %p225 = pneg %p44
        %p226 = pneg %p68
        %p227 = pneg %p65
        %p228 = pneg %p94
        %p229 = pneg %p91
        %s230 = sand.u32 %s81, 1
        %s231 = scalar_lea.sflag [#allocation4], %s230
        %s232 = sand.u32 %s81, 1
        %s233 = smul.addr %s232, 64
        %s234 = scalar_lea.vmem [#allocation7], %s233
        %p235 = pneg %p120
        %p236 = pneg %p117
        %s237 = sand.u32 %s26, 1
        %s238 = scalar_lea.sflag [#allocation9], %s237
        %s239 = sand.u32 %s107, 1
        %s240 = smul.addr %s239, 64
        %s241 = scalar_lea.vmem [#allocation8], %s240
        %p242 = pneg %p146
        %p243 = pneg %p143
        %s244 = sand.u32 %s26, 1
        %s245 = scalar_lea.sflag [#allocation9], %s244
        %s246 = sand.u32 %s133, 1
        %s247 = smul.addr %s246, 64
        %s248 = scalar_lea.vmem [#allocation10], %s247
        %s249 = smul.u32 8, %s26
        %s250 = smul.u32 8, %s26
        %s251 = smul.u32 8, %s26
        %s252 = smul.u32 8, %s26
        %v253 = vld [vmem:[%s210] sm:$0xff]
        %v254 = vld [vmem:[%s210 + $0x8] sm:$0xff]
        %v255 = vld [vmem:[%s210 + $0x10] sm:$0xff]
        %v256 = vld [vmem:[%s210 + $0x18] sm:$0xff]
        %v257 = vld [vmem:[%s210 + $0x20] sm:$0xff]
        %v258 = vld [vmem:[%s210 + $0x28] sm:$0xff]
        %v259 = vld [vmem:[%s210 + $0x30] sm:$0xff]
        %v260 = vld [vmem:[%s210 + $0x38] sm:$0xff]
        %v261 = vld [vmem:[#allocation5] sm:$0xff]
        %v262 = vld [vmem:[#allocation5 + $0x8] sm:$0xff]
        %v263 = vld [vmem:[#allocation5 + $0x10] sm:$0xff]
        %v264 = vld [vmem:[#allocation5 + $0x18] sm:$0xff]
        %v265 = vld [vmem:[#allocation5 + $0x20] sm:$0xff]
        %v266 = vld [vmem:[#allocation5 + $0x28] sm:$0xff]
        %v267 = vld [vmem:[#allocation5 + $0x30] sm:$0xff]
        %v268 = vld [vmem:[#allocation5 + $0x38] sm:$0xff]
        %v269 = vld [vmem:[#allocation5 + $0x40] sm:$0xff]
        %v270 = vld [vmem:[#allocation5 + $0x48] sm:$0xff]
        %v271 = vld [vmem:[#allocation5 + $0x50] sm:$0xff]
        %v272 = vld [vmem:[#allocation5 + $0x58] sm:$0xff]
        %v273 = vld [vmem:[#allocation5 + $0x60] sm:$0xff]
        %v274 = vld [vmem:[#allocation5 + $0x68] sm:$0xff]
        %v275 = vld [vmem:[#allocation5 + $0x70] sm:$0xff]
        %v276 = vld [vmem:[#allocation5 + $0x78] sm:$0xff]
        %v277 = vld [vmem:[#allocation5 + $0x80] sm:$0xff]
        %v278 = vld [vmem:[#allocation5 + $0x88] sm:$0xff]
        %v279 = vld [vmem:[#allocation5 + $0x90] sm:$0xff]
        %v280 = vld [vmem:[#allocation5 + $0x98] sm:$0xff]
        %v281 = vld [vmem:[#allocation5 + $0xa0] sm:$0xff]
        %v282 = vld [vmem:[#allocation5 + $0xa8] sm:$0xff]
        %v283 = vld [vmem:[#allocation5 + $0xb0] sm:$0xff]
        %v284 = vld [vmem:[#allocation5 + $0xb8] sm:$0xff]
        %v285 = vld [vmem:[#allocation5 + $0xc0] sm:$0xff]
        %v286 = vld [vmem:[#allocation5 + $0xc8] sm:$0xff]
        %v287 = vld [vmem:[#allocation5 + $0xd0] sm:$0xff]
        %v288 = vld [vmem:[#allocation5 + $0xd8] sm:$0xff]
        %v289 = vld [vmem:[#allocation5 + $0xe0] sm:$0xff]
        %v290 = vld [vmem:[#allocation5 + $0xe8] sm:$0xff]
        %v291 = vld [vmem:[#allocation5 + $0xf0] sm:$0xff]
        %v292 = vld [vmem:[#allocation5 + $0xf8] sm:$0xff]
        %v293 = vld [vmem:[#allocation5 + $0x100] sm:$0xff]
        %v294 = vld [vmem:[#allocation5 + $0x108] sm:$0xff]
        %v295 = vld [vmem:[#allocation5 + $0x110] sm:$0xff]
        %v296 = vld [vmem:[#allocation5 + $0x118] sm:$0xff]
        %v297 = vld [vmem:[#allocation5 + $0x120] sm:$0xff]
        %v298 = vld [vmem:[#allocation5 + $0x128] sm:$0xff]
        %v299 = vld [vmem:[#allocation5 + $0x130] sm:$0xff]
        %v300 = vld [vmem:[#allocation5 + $0x138] sm:$0xff]
        %v301 = vld [vmem:[#allocation5 + $0x140] sm:$0xff]
        %v302 = vld [vmem:[#allocation5 + $0x148] sm:$0xff]
        %v303 = vld [vmem:[#allocation5 + $0x150] sm:$0xff]
        %v304 = vld [vmem:[#allocation5 + $0x158] sm:$0xff]
        %v305 = vld [vmem:[#allocation5 + $0x160] sm:$0xff]
        %v306 = vld [vmem:[#allocation5 + $0x168] sm:$0xff]
        %v307 = vld [vmem:[#allocation5 + $0x170] sm:$0xff]
        %v308 = vld [vmem:[#allocation5 + $0x178] sm:$0xff]
        %309 = vmatprep.subr.mxu0 %v262
        %310 = vmatpush1.msra.mxu0 %v261
        %311 = vmatprep.subr.mxu0 %v265
        %312 = vmatpush1.msra.mxu0 %v264
        %313 = vmatprep.subr.mxu0 %v268
        %314 = vmatpush1.msra.mxu0 %v267
        %315 = vmatprep.subr.mxu0 %v271
        %316 = vmatpush1.msra.mxu0 %v270
        %317 = vmatprep.subr.mxu0 %v274
        %318 = vmatpush1.msra.mxu0 %v273
        %319 = vmatprep.subr.mxu0 %v277
        %320 = vmatpush1.msra.mxu0 %v276
        %321 = vmatprep.subr.mxu0 %v280
        %322 = vmatpush1.msra.mxu0 %v279
        %323 = vmatprep.subr.mxu0 %v283
        %324 = vmatpush1.msra.mxu0 %v282
        %325 = vmatprep.subr.mxu0 %v286
        %326 = vmatpush1.msra.mxu0 %v285
        %327 = vmatprep.subr.mxu0 %v289
        %328 = vmatpush1.msra.mxu0 %v288
        %329 = vmatprep.subr.mxu0 %v292
        %330 = vmatpush1.msra.mxu0 %v291
        %331 = vmatprep.subr.mxu0 %v295
        %332 = vmatpush1.msra.mxu0 %v294
        %333 = vmatprep.subr.mxu0 %v298
        %334 = vmatpush1.msra.mxu0 %v297
        %335 = vmatprep.subr.mxu0 %v301
        %336 = vmatpush1.msra.mxu0 %v300
        %337 = vmatprep.subr.mxu0 %v304
        %338 = vmatpush1.msra.mxu0 %v303
        %339 = vmatprep.subr.mxu0 %v307
        %340 = vmatpush1.msra.mxu0 %v306
        %341 = vmatprep.subr.mxu0 0.0
        %342 = vmatpush1.msra.mxu0 0.0
        %343 = vmatprep.subr.mxu0 0.0
        %344 = vmatpush1.msra.mxu0 0.0
        %345 = vmatprep.subr.mxu0 0.0
        %346 = vmatpush1.msra.mxu0 0.0
        %347 = vmatprep.subr.mxu0 0.0
        %348 = vmatpush1.msra.mxu0 0.0
        %349 = vmatprep.subr.mxu0 0.0
        %350 = vmatpush1.msra.mxu0 0.0
        %351 = vmatprep.subr.mxu0 0.0
        %352 = vmatpush1.msra.mxu0 0.0
        %353 = vmatprep.subr.mxu0 0.0
        %354 = vmatpush1.msra.mxu0 0.0
        %355 = vmatprep.subr.mxu0 0.0
        %356 = vmatpush1.msra.mxu0 0.0
        %357 = vmatprep.subr.mxu0 0.0
        %358 = vmatpush1.msra.mxu0 0.0
        %359 = vmatprep.subr.mxu0 0.0
        %360 = vmatpush1.msra.mxu0 0.0
        %361 = vmatprep.subr.mxu0 0.0
        %362 = vmatpush1.msra.mxu0 0.0
        %363 = vmatprep.subr.mxu0 0.0
        %364 = vmatpush1.msra.mxu0 0.0
        %365 = vmatprep.subr.mxu0 0.0
        %366 = vmatpush1.msra.mxu0 0.0
        %367 = vmatprep.subr.mxu0 0.0
        %368 = vmatpush1.msra.mxu0 0.0
        %369 = vmatprep.subr.mxu0 0.0
        %370 = vmatpush1.msra.mxu0 0.0
        %371 = vmatprep.subr.mxu0 0.0
        %372 = vmatpush1.msra.mxu0 0.0
        %373 = vmatprep.mubr.f32.mxu0 0.0
        %374 = vmatmul.mubr.f32.gmra.mrb[0].mxu0 %v253
        %v375 = vpop.f32.mrb[0].mxu0
        %v376 = vadd.f32 0.0, %v375
        %v377 = vpop.f32.mrb[0].mxu0
        %v378 = vadd.f32 0.0, %v377
        %379 = vmatprep.mubr.f32.mxu0 0.0
        %380 = vmatmul.mubr.f32.gmra.mrb[0].mxu0 %v254
        %v381 = vpop.f32.mrb[0].mxu0
        %v382 = vadd.f32 0.0, %v381
        %v383 = vpop.f32.mrb[0].mxu0
        %v384 = vadd.f32 0.0, %v383
        %385 = vmatprep.mubr.f32.mxu0 0.0
        %386 = vmatmul.mubr.f32.gmra.mrb[0].mxu0 %v255
        %v387 = vpop.f32.mrb[0].mxu0
        %v388 = vadd.f32 0.0, %v387
        %v389 = vpop.f32.mrb[0].mxu0
        %v390 = vadd.f32 0.0, %v389
        %391 = vmatprep.mubr.f32.mxu0 0.0
        %392 = vmatmul.mubr.f32.gmra.mrb[0].mxu0 %v256
        %v393 = vpop.f32.mrb[0].mxu0
        %v394 = vadd.f32 0.0, %v393
        %v395 = vpop.f32.mrb[0].mxu0
        %v396 = vadd.f32 0.0, %v395
        %397 = vmatprep.mubr.f32.mxu0 0.0
        %398 = vmatmul.mubr.f32.gmra.mrb[0].mxu0 %v257
        %v399 = vpop.f32.mrb[0].mxu0
        %v400 = vadd.f32 0.0, %v399
        %v401 = vpop.f32.mrb[0].mxu0
        %v402 = vadd.f32 0.0, %v401
        %403 = vmatprep.mubr.f32.mxu0 0.0
        %404 = vmatmul.mubr.f32.gmra.mrb[0].mxu0 %v258
        %v405 = vpop.f32.mrb[0].mxu0
        %v406 = vadd.f32 0.0, %v405
        %v407 = vpop.f32.mrb[0].mxu0
        %v408 = vadd.f32 0.0, %v407
        %409 = vmatprep.mubr.f32.mxu0 0.0
        %410 = vmatmul.mubr.f32.gmra.mrb[0].mxu0 %v259
        %v411 = vpop.f32.mrb[0].mxu0
        %v412 = vadd.f32 0.0, %v411
        %v413 = vpop.f32.mrb[0].mxu0
        %v414 = vadd.f32 0.0, %v413
        %415 = vmatprep.mubr.f32.mxu0 0.0
        %416 = vmatmul.mubr.f32.gmra.mrb[0].mxu0 %v260
        %v417 = vpop.f32.mrb[0].mxu0
        %v418 = vadd.f32 0.0, %v417
        %v419 = vpop.f32.mrb[0].mxu0
        %v420 = vadd.f32 0.0, %v419
        %421 = vdwg.mxu0
        %422 = vmatprep.subr.mxu0 0.0
        %423 = vmatpush1.msra.mxu0 %v263
        %424 = vmatprep.subr.mxu0 0.0
        %425 = vmatpush1.msra.mxu0 %v266
        %426 = vmatprep.subr.mxu0 0.0
        %427 = vmatpush1.msra.mxu0 %v269
        %428 = vmatprep.subr.mxu0 0.0
        %429 = vmatpush1.msra.mxu0 %v272
        %430 = vmatprep.subr.mxu0 0.0
        %431 = vmatpush1.msra.mxu0 %v275
        %432 = vmatprep.subr.mxu0 0.0
        %433 = vmatpush1.msra.mxu0 %v278
        %434 = vmatprep.subr.mxu0 0.0
        %435 = vmatpush1.msra.mxu0 %v281
        %436 = vmatprep.subr.mxu0 0.0
        %437 = vmatpush1.msra.mxu0 %v284
        %438 = vmatprep.subr.mxu0 0.0
        %439 = vmatpush1.msra.mxu0 %v287
        %440 = vmatprep.subr.mxu0 0.0
        %441 = vmatpush1.msra.mxu0 %v290
        %442 = vmatprep.subr.mxu0 0.0
        %443 = vmatpush1.msra.mxu0 %v293
        %444 = vmatprep.subr.mxu0 0.0
        %445 = vmatpush1.msra.mxu0 %v296
        %446 = vmatprep.subr.mxu0 0.0
        %447 = vmatpush1.msra.mxu0 %v299
        %448 = vmatprep.subr.mxu0 0.0
        %449 = vmatpush1.msra.mxu0 %v302
        %450 = vmatprep.subr.mxu0 0.0
        %451 = vmatpush1.msra.mxu0 %v305
        %452 = vmatprep.subr.mxu0 0.0
        %453 = vmatpush1.msra.mxu0 %v308
        %454 = vmatprep.subr.mxu0 0.0
        %455 = vmatpush1.msra.mxu0 0.0
        %456 = vmatprep.subr.mxu0 0.0
        %457 = vmatpush1.msra.mxu0 0.0
        %458 = vmatprep.subr.mxu0 0.0
        %459 = vmatpush1.msra.mxu0 0.0
        %460 = vmatprep.subr.mxu0 0.0
        %461 = vmatpush1.msra.mxu0 0.0
        %462 = vmatprep.subr.mxu0 0.0
        %463 = vmatpush1.msra.mxu0 0.0
        %464 = vmatprep.subr.mxu0 0.0
        %465 = vmatpush1.msra.mxu0 0.0
        %466 = vmatprep.subr.mxu0 0.0
        %467 = vmatpush1.msra.mxu0 0.0
        %468 = vmatprep.subr.mxu0 0.0
        %469 = vmatpush1.msra.mxu0 0.0
        %470 = vmatprep.subr.mxu0 0.0
        %471 = vmatpush1.msra.mxu0 0.0
        %472 = vmatprep.subr.mxu0 0.0
        %473 = vmatpush1.msra.mxu0 0.0
        %474 = vmatprep.subr.mxu0 0.0
        %475 = vmatpush1.msra.mxu0 0.0
        %476 = vmatprep.subr.mxu0 0.0
        %477 = vmatpush1.msra.mxu0 0.0
        %478 = vmatprep.subr.mxu0 0.0
        %479 = vmatpush1.msra.mxu0 0.0
        %480 = vmatprep.subr.mxu0 0.0
        %481 = vmatpush1.msra.mxu0 0.0
        %482 = vmatprep.subr.mxu0 0.0
        %483 = vmatpush1.msra.mxu0 0.0
        %484 = vmatprep.subr.mxu0 0.0
        %485 = vmatpush1.msra.mxu0 0.0
        %486 = vmatprep.mubr.f32.mxu0 0.0
        %487 = vmatmul.mubr.f32.gmra.mrb[0].mxu0 %v253
        %v488 = vpop.f32.mrb[0].mxu0
        %v489 = vadd.f32 0.0, %v488
        %v490 = vpop.f32.mrb[0].mxu0
        %491 = vmatprep.mubr.f32.mxu0 0.0
        %492 = vmatmul.mubr.f32.gmra.mrb[0].mxu0 %v254
        %v493 = vpop.f32.mrb[0].mxu0
        %v494 = vadd.f32 0.0, %v493
        %v495 = vpop.f32.mrb[0].mxu0
        %496 = vmatprep.mubr.f32.mxu0 0.0
        %497 = vmatmul.mubr.f32.gmra.mrb[0].mxu0 %v255
        %v498 = vpop.f32.mrb[0].mxu0
        %v499 = vadd.f32 0.0, %v498
        %v500 = vpop.f32.mrb[0].mxu0
        %501 = vmatprep.mubr.f32.mxu0 0.0
        %502 = vmatmul.mubr.f32.gmra.mrb[0].mxu0 %v256
        %v503 = vpop.f32.mrb[0].mxu0
        %v504 = vadd.f32 0.0, %v503
        %v505 = vpop.f32.mrb[0].mxu0
        %506 = vmatprep.mubr.f32.mxu0 0.0
        %507 = vmatmul.mubr.f32.gmra.mrb[0].mxu0 %v257
        %v508 = vpop.f32.mrb[0].mxu0
        %v509 = vadd.f32 0.0, %v508
        %v510 = vpop.f32.mrb[0].mxu0
        %511 = vmatprep.mubr.f32.mxu0 0.0
        %512 = vmatmul.mubr.f32.gmra.mrb[0].mxu0 %v258
        %v513 = vpop.f32.mrb[0].mxu0
        %v514 = vadd.f32 0.0, %v513
        %v515 = vpop.f32.mrb[0].mxu0
        %516 = vmatprep.mubr.f32.mxu0 0.0
        %517 = vmatmul.mubr.f32.gmra.mrb[0].mxu0 %v259
        %v518 = vpop.f32.mrb[0].mxu0
        %v519 = vadd.f32 0.0, %v518
        %v520 = vpop.f32.mrb[0].mxu0
        %521 = vmatprep.mubr.f32.mxu0 0.0
        %522 = vmatmul.mubr.f32.gmra.mrb[0].mxu0 %v260
        %v523 = vpop.f32.mrb[0].mxu0
        %v524 = vadd.f32 0.0, %v523
        %v525 = vpop.f32.mrb[0].mxu0
        %526 = vdwg.mxu0
        %v527 = vmul.f32 %v376, 0.25
        %v528 = vmul.f32 %v382, 0.25
        %v529 = vmul.f32 %v388, 0.25
        %v530 = vmul.f32 %v394, 0.25
        %v531 = vmul.f32 %v400, 0.25
        %v532 = vmul.f32 %v406, 0.25
        %v533 = vmul.f32 %v412, 0.25
        %v534 = vmul.f32 %v418, 0.25
        %535 = vst [vmem:[%s234] sm:$0xff] %v527
        %536 = vst [vmem:[%s234 + $0x8] sm:$0xff] %v528
        %537 = vst [vmem:[%s234 + $0x10] sm:$0xff] %v529
        %538 = vst [vmem:[%s234 + $0x18] sm:$0xff] %v530
        %539 = vst [vmem:[%s234 + $0x20] sm:$0xff] %v531
        %540 = vst [vmem:[%s234 + $0x28] sm:$0xff] %v532
        %541 = vst [vmem:[%s234 + $0x30] sm:$0xff] %v533
        %542 = vst [vmem:[%s234 + $0x38] sm:$0xff] %v534
        %543 = vst [vmem:[%s241] sm:$0xff] %v378
        %544 = vst [vmem:[%s241 + $0x8] sm:$0xff] %v384
        %545 = vst [vmem:[%s241 + $0x10] sm:$0xff] %v390
        %546 = vst [vmem:[%s241 + $0x18] sm:$0xff] %v396
        %547 = vst [vmem:[%s241 + $0x20] sm:$0xff] %v402
        %548 = vst [vmem:[%s241 + $0x28] sm:$0xff] %v408
        %549 = vst [vmem:[%s241 + $0x30] sm:$0xff] %v414
        %550 = vst [vmem:[%s241 + $0x38] sm:$0xff] %v420
        %551 = vst [vmem:[%s248] sm:$0xff] %v489
        %552 = vst [vmem:[%s248 + $0x8] sm:$0xff] %v494
        %553 = vst [vmem:[%s248 + $0x10] sm:$0xff] %v499
        %554 = vst [vmem:[%s248 + $0x18] sm:$0xff] %v504
        %555 = vst [vmem:[%s248 + $0x20] sm:$0xff] %v509
        %556 = vst [vmem:[%s248 + $0x28] sm:$0xff] %v514
        %557 = vst [vmem:[%s248 + $0x30] sm:$0xff] %v519
        %558 = vst [vmem:[%s248 + $0x38] sm:$0xff] %v524
        %s559 = sand.u32 %s81, 1
        %s560 = scalar_lea.sflag [#allocation4], %s559
        %s561 = sand.u32 %s81, 1
        %s562 = smul.addr %s561, 64
        %s563 = scalar_lea.vmem [#allocation7], %s562
        %s564 = sand.u32 %s26, 1
        %s565 = scalar_lea.sflag [#allocation9], %s564
        %s566 = sand.u32 %s107, 1
        %s567 = smul.addr %s566, 64
        %s568 = scalar_lea.vmem [#allocation8], %s567
        %s569 = sand.u32 %s26, 1
        %s570 = scalar_lea.sflag [#allocation9], %s569
        %s571 = sand.u32 %s133, 1
        %s572 = smul.addr %s571, 64
        %s573 = scalar_lea.vmem [#allocation10], %s572
        // Predicated region
        $region37: #{tpu_custom_call.1} parent=27 // pred_check
          %p574 = pneg %p91
        $region38: #{tpu_custom_call.1} parent=27 // pred_check_branch
          %576 = sbr.rel (%p574) target = $region40
        $region39: #{tpu_custom_call.1} parent=27 // pred_region
          %s577 = smul.u32 8, %s26
          %s579 = ssub.s32 1024, 1024
          %580 = vsyncadd %s560, %s579
          %s581 = smul.addr %s577, 128
          %s582 = scalar_lea.hbm %s2, %s581
          %s583 = sshll.u32 %s563, 4
          %s584 = int_to_ptr.vmem [resolvable:$true] %s583
          %589 = dma.vmem_to_hbm [thread:$0]  %s584, 1024, %s582, %s560, 128, 128, 8
        $region40: #{tpu_custom_call.1} parent=27 // pred_fallthru
          _
        // Predicated region
        $region41: #{tpu_custom_call.1} parent=27 // pred_check
          %p590 = pneg %p117
        $region42: #{tpu_custom_call.1} parent=27 // pred_check_branch
          %592 = sbr.rel (%p590) target = $region44
        $region43: #{tpu_custom_call.1} parent=27 // pred_region
          %s593 = smul.u32 8, %s26
          %s595 = ssub.s32 1024, 1024
          %596 = vsyncadd %s565, %s595
          %s597 = smul.addr %s593, 128
          %s598 = scalar_lea.hbm %s3, %s597
          %s599 = sshll.u32 %s568, 4
          %s600 = int_to_ptr.vmem [resolvable:$true] %s599
          %605 = dma.vmem_to_hbm [thread:$0]  %s600, 1024, %s598, %s565, 128, 128, 8
        $region44: #{tpu_custom_call.1} parent=27 // pred_fallthru
          _
        // Predicated region
        $region45: #{tpu_custom_call.1} parent=27 // pred_check
          %p606 = pneg %p143
        $region46: #{tpu_custom_call.1} parent=27 // pred_check_branch
          %608 = sbr.rel (%p606) target = $region48
        $region47: #{tpu_custom_call.1} parent=27 // pred_region
          %s609 = smul.u32 8, %s26
          %s611 = ssub.s32 1024, 1024
          %612 = vsyncadd %s570, %s611
          %s613 = smul.addr %s609, 128
          %s614 = scalar_lea.hbm %s4, %s613
          %s615 = sshll.u32 %s573, 4
          %s616 = int_to_ptr.vmem [resolvable:$true] %s615
          %621 = dma.vmem_to_hbm [thread:$0]  %s616, 1024, %s614, %s570, 128, 128, 8
        $region48: #{tpu_custom_call.1} parent=27 // pred_fallthru
          _
      $region28: #{tpu_custom_call.1} parent=5 // pred_fallthru
        _
      %p622 = scmp.le.s32.totalorder 2, %s21
      // Predicated region
      $region49: #{tpu_custom_call.1} parent=5 // pred_check
        %p623 = pneg %p622
      $region50: #{tpu_custom_call.1} parent=5 // pred_check_branch
        %625 = sbr.rel (%p623) target = $region52
      $region51: #{tpu_custom_call.1} parent=5 // pred_region
        %s626 = ssub.s32 %s21, 2
        // Predicated region
        $region53: #{tpu_custom_call.1} parent=51 // pred_check
          %p627 = pneg %p97
        $region54: #{tpu_custom_call.1} parent=51 // pred_check_branch
          %629 = sbr.rel (%p627) target = $region56
        $region55: #{tpu_custom_call.1} parent=51 // pred_region
          %s630 = sand.u32 %s82, 1
          %s631 = scalar_lea.sflag [#allocation4], %s630
          %s632 = sand.u32 %s82, 1
          %s633 = smul.addr %s632, 64
          %s634 = scalar_lea.vmem [#allocation7], %s633
          %635 = dma.done %s631, 1024
        $region56: #{tpu_custom_call.1} parent=51 // pred_fallthru
          _
        // Predicated region
        $region57: #{tpu_custom_call.1} parent=51 // pred_check
          %p636 = pneg %p123
        $region58: #{tpu_custom_call.1} parent=51 // pred_check_branch
          %638 = sbr.rel (%p636) target = $region60
        $region59: #{tpu_custom_call.1} parent=51 // pred_region
          %s639 = sand.u32 %s27, 1
          %s640 = scalar_lea.sflag [#allocation9], %s639
          %s641 = sand.u32 %s108, 1
          %s642 = smul.addr %s641, 64
          %s643 = scalar_lea.vmem [#allocation8], %s642
          %644 = dma.done %s640, 1024
        $region60: #{tpu_custom_call.1} parent=51 // pred_fallthru
          _
        // Predicated region
        $region61: #{tpu_custom_call.1} parent=51 // pred_check
          %p645 = pneg %p149
        $region62: #{tpu_custom_call.1} parent=51 // pred_check_branch
          %647 = sbr.rel (%p645) target = $region64
        $region63: #{tpu_custom_call.1} parent=51 // pred_region
          %s648 = sand.u32 %s27, 1
          %s649 = scalar_lea.sflag [#allocation9], %s648
          %s650 = sand.u32 %s134, 1
          %s651 = smul.addr %s650, 64
          %s652 = scalar_lea.vmem [#allocation10], %s651
          %653 = dma.done %s649, 1024
        $region64: #{tpu_custom_call.1} parent=51 // pred_fallthru
          _
      $region52: #{tpu_custom_call.1} parent=5 // pred_fallthru
        _
    $region6: #{tpu_custom_call.1} parent=1 // loop_footer
      %s25 = sadd.s32 1, %s21
    $region7: #{tpu_custom_call.1} parent=1 // loop_footer_branch
      %20 = sbr.rel target = $region3
    $region8: #{tpu_custom_call.1} parent=1 // loop_exit
      _
    %654 = vsyncpa [#allocation3], 1
    %s655 = scalar_lea.sflag [#allocation3], 1
    %656 = vsyncpa %s655, 1
    %657 = vsyncpa [#allocation6], 1
    %658 = vsyncpa [#allocation4], 1
    %s659 = scalar_lea.sflag [#allocation4], 1
    %660 = vsyncpa %s659, 1
    %661 = vsyncpa [#allocation9], 1
    %s662 = scalar_lea.sflag [#allocation9], 1
    %663 = vsyncpa %s662, 1

</llo_original>
